<compile_context>
chip_gen: v6e
topology: v6e:2x2x1
jax: 0.10.0
libtpu: 0.0.40
codegen_flags: <defaults>
</compile_context>

<pallas_src>
import math

import jax
import jax.numpy as jnp
from jax.experimental import pallas as pl
from jax.experimental.pallas import tpu as pltpu

N_EMBD = 72
HIDDEN = 4 * N_EMBD          # 288
H_PAD = 384                  # lane-dense hidden dim (3 x 128 lanes)
TM_MAX = 1024                # max rows per grid step


def _round_up(x, m):
    return (x + m - 1) // m * m


def ffwd_kernel(x_ref, w1_ref, b1_ref, w2_ref, b2_ref, o_ref):
    """One (TM, 72) row tile:  relu(x @ W1 + b1) @ W2 + b2.

    x_ref : (TM, 72)     f32  (cast to bf16 in-kernel for the MXU)
    w1_ref: (72, H_PAD)  bf16     b1_ref: (1, H_PAD) f32
    w2_ref: (H_PAD, 72)  bf16     b2_ref: (1, 72)    f32
    o_ref : (TM, 72)     f32
    """
    x = x_ref[...].astype(jnp.bfloat16)
    h = jnp.dot(x, w1_ref[...], preferred_element_type=jnp.float32)      # (TM, H_PAD)
    h = jnp.maximum(h + b1_ref[...], 0.0)                                 # bias + ReLU in f32
    y = jnp.dot(h.astype(jnp.bfloat16), w2_ref[...],
                preferred_element_type=jnp.float32)                       # (TM, 72)
    o_ref[...] = y + b2_ref[...]
    # Dropout(p=0.0) is the identity -> nothing to do.


def prepare_params(p):
    """Zero-pad the hidden dim to 384 once; cast matmul operands to bf16."""
    w1 = jnp.zeros((N_EMBD, H_PAD), jnp.float32).at[:, :HIDDEN].set(p["w1"])
    b1 = jnp.zeros((1, H_PAD), jnp.float32).at[:, :HIDDEN].set(p["b1"])
    w2 = jnp.zeros((H_PAD, N_EMBD), jnp.float32).at[:HIDDEN, :].set(p["w2"])
    b2 = p["b2"].astype(jnp.float32).reshape(1, N_EMBD)
    return {
        "w1": w1.astype(jnp.bfloat16), "b1": b1,
        "w2": w2.astype(jnp.bfloat16), "b2": b2,
    }


def feed_forward(x, prepared):
    """x: (..., 72) float32 -> (..., 72) float32."""
    orig_shape = x.shape
    C = orig_shape[-1]
    assert C == N_EMBD
    M = int(math.prod(orig_shape[:-1]))

    # Flatten leading dims into one row axis (free: contiguous last dim).
    x2 = x.reshape(M, C)

    # Row tile: big (up to 1024) to amortize per-step overhead, but sized to
    # ~half of M so large M yields >= 2 tiles for v7x's two TensorCores.
    tm = min(TM_MAX, _round_up(max(pl.cdiv(M, 2), 1), 16))
    grid = pl.cdiv(M, tm)

    flops = 4 * M * N_EMBD * HIDDEN                       # two matmuls
    bytes_accessed = (M * C * 4 * 2                       # x read + y write (f32)
                      + N_EMBD * H_PAD * 2 + H_PAD * 4    # W1 bf16 + b1 f32
                      + H_PAD * N_EMBD * 2 + N_EMBD * 4)  # W2 bf16 + b2 f32

    out = pl.pallas_call(
        ffwd_kernel,
        out_shape=jax.ShapeDtypeStruct((M, C), jnp.float32),
        grid=(grid,),
        in_specs=[
            pl.BlockSpec((tm, C), lambda i: (i, 0)),           # x row tile (full 72-wide)
            pl.BlockSpec((N_EMBD, H_PAD), lambda i: (0, 0)),   # W1 (resident)
            pl.BlockSpec((1, H_PAD), lambda i: (0, 0)),        # b1
            pl.BlockSpec((H_PAD, N_EMBD), lambda i: (0, 0)),   # W2 (resident)
            pl.BlockSpec((1, N_EMBD), lambda i: (0, 0)),       # b2
        ],
        out_specs=pl.BlockSpec((tm, C), lambda i: (i, 0)),
        compiler_params=pltpu.CompilerParams(
            dimension_semantics=("parallel",)),
        cost_estimate=pl.CostEstimate(flops=flops, transcendentals=0,
                                      bytes_accessed=bytes_accessed),
    )(x2, prepared["w1"], prepared["b1"], prepared["w2"], prepared["b2"])

    return out.reshape(orig_shape)


def make_params(key):
    ks = jax.random.split(key, 4)
    s = 0.02
    return {
        "w1": s * jax.random.normal(ks[0], (N_EMBD, HIDDEN), jnp.float32),
        "b1": s * jax.random.normal(ks[1], (1, HIDDEN), jnp.float32),
        "w2": s * jax.random.normal(ks[2], (HIDDEN, N_EMBD), jnp.float32),
        "b2": s * jax.random.normal(ks[3], (1, N_EMBD), jnp.float32),
    }


def reference(x, p):
    """Pure-JAX f32 reference mirroring the PyTorch forward (dropout = 0)."""
    h = jnp.maximum(x @ p["w1"] + p["b1"][0], 0.0)
    return h @ p["w2"] + p["b2"][0]


if __name__ == "__main__":
    key = jax.random.PRNGKey(0)
    k_x, k_p = jax.random.split(key)

    B, T = 2, 8                       # small shapes: (batch, seq, n_embd)
    x = jax.random.normal(k_x, (B, T, N_EMBD), jnp.float32)

    params = make_params(k_p)
    prepared = prepare_params(params)

    out = feed_forward(x, prepared)
    out = jax.block_until_ready(out)

    ref = reference(x, params)
    assert out.shape == (B, T, N_EMBD)
    max_err = float(jnp.max(jnp.abs(out - ref)))
    # bf16 matmul operands with f32 accumulation -> ~1e-3-level absolute error
    # at these magnitudes.
    assert max_err < 5e-3, f"mismatch vs reference: max abs err {max_err}"

    print("KERNEL_OK")
</pallas_src>

<mosaic_0001>
module attributes {stable_mosaic.version = 11 : i64} {
  func.func @ffwd_kernel(%arg0: i32, %arg1: memref<16x72xf32, #tpu.memory_space<vmem>>, %arg2: memref<72x384xbf16, #tpu.memory_space<vmem>>, %arg3: memref<1x384xf32, #tpu.memory_space<vmem>>, %arg4: memref<384x72xbf16, #tpu.memory_space<vmem>>, %arg5: memref<1x72xf32, #tpu.memory_space<vmem>>, %arg6: memref<16x72xf32, #tpu.memory_space<vmem>>) attributes {dimension_semantics = [#tpu.dimension_semantics<parallel>], iteration_bounds = array<i64: 1>, scalar_prefetch = 0 : i64, scratch_operands = 0 : i64, tpu.core_type = #tpu.core_type<tc>, window_params = [{transform_indices = @transform_0, window_bounds = array<i64: 16, 72>}, {pipeline_mode = #tpu.pipeline_mode<synchronous>, transform_indices = @transform_1, window_bounds = array<i64: 72, 384>}, {pipeline_mode = #tpu.pipeline_mode<synchronous>, transform_indices = @transform_2, window_bounds = array<i64: 1, 384>}, {pipeline_mode = #tpu.pipeline_mode<synchronous>, transform_indices = @transform_3, window_bounds = array<i64: 384, 72>}, {pipeline_mode = #tpu.pipeline_mode<synchronous>, transform_indices = @transform_4, window_bounds = array<i64: 1, 72>}, {transform_indices = @transform_5, window_bounds = array<i64: 16, 72>}]} {
    %c0 = arith.constant 0 : index
    %c0_0 = arith.constant 0 : index
    %0 = vector.load %arg1[%c0, %c0_0] : memref<16x72xf32, #tpu.memory_space<vmem>>, vector<16x72xf32>
    %1 = arith.truncf %0 : vector<16x72xf32> to vector<16x72xbf16>
    %c0_1 = arith.constant 0 : index
    %c0_2 = arith.constant 0 : index
    %2 = vector.load %arg2[%c0_1, %c0_2] : memref<72x384xbf16, #tpu.memory_space<vmem>>, vector<72x384xbf16>
    %cst = arith.constant dense<0.000000e+00> : vector<16x384xf32>
    %3 = tpu.matmul %1, %2, %cst {dimension_numbers = #tpu.dot_dimension_numbers<[1], [0], [0], [1], [0, 0, 1, 1], [], []>} : vector<16x72xbf16>, vector<72x384xbf16>, vector<16x384xf32> -> vector<16x384xf32>
    %c0_3 = arith.constant 0 : index
    %c0_4 = arith.constant 0 : index
    %4 = vector.load %arg3[%c0_3, %c0_4] : memref<1x384xf32, #tpu.memory_space<vmem>>, vector<1x384xf32>
    %5 = vector.broadcast %4 : vector<1x384xf32> to vector<16x384xf32>
    %6 = arith.addf %3, %5 : vector<16x384xf32>
    %cst_5 = arith.constant 0.000000e+00 : f32
    %7 = vector.broadcast %cst_5 : f32 to vector<16x384xf32>
    %8 = arith.maximumf %6, %7 : vector<16x384xf32>
    %9 = arith.truncf %8 : vector<16x384xf32> to vector<16x384xbf16>
    %c0_6 = arith.constant 0 : index
    %c0_7 = arith.constant 0 : index
    %10 = vector.load %arg4[%c0_6, %c0_7] : memref<384x72xbf16, #tpu.memory_space<vmem>>, vector<384x72xbf16>
    %cst_8 = arith.constant dense<0.000000e+00> : vector<16x72xf32>
    %11 = tpu.matmul %9, %10, %cst_8 {dimension_numbers = #tpu.dot_dimension_numbers<[1], [0], [0], [1], [0, 0, 1, 1], [], []>} : vector<16x384xbf16>, vector<384x72xbf16>, vector<16x72xf32> -> vector<16x72xf32>
    %c0_9 = arith.constant 0 : index
    %c0_10 = arith.constant 0 : index
    %12 = vector.load %arg5[%c0_9, %c0_10] : memref<1x72xf32, #tpu.memory_space<vmem>>, vector<1x72xf32>
    %13 = vector.broadcast %12 : vector<1x72xf32> to vector<16x72xf32>
    %14 = arith.addf %11, %13 : vector<16x72xf32>
    %c0_11 = arith.constant 0 : index
    %c0_12 = arith.constant 0 : index
    %15 = vector.load %arg6[%c0_11, %c0_12] : memref<16x72xf32, #tpu.memory_space<vmem>>, vector<16x72xf32>
    tpu.vector_store %arg6[%c0_11, %c0_12], %14 {strides = array<i32>} : memref<16x72xf32, #tpu.memory_space<vmem>>, vector<16x72xf32>,
    return
  }
  func.func @transform_0(%arg0: i32) -> (i32, i32) {
    %c0_i32 = arith.constant 0 : i32
    %c0_i32_0 = arith.constant 0 : i32
    return %arg0, %c0_i32 : i32, i32
  }
  func.func @transform_1(%arg0: i32) -> (i32, i32) {
    %c0_i32 = arith.constant 0 : i32
    %c0_i32_0 = arith.constant 0 : i32
    %c0_i32_1 = arith.constant 0 : i32
    return %c0_i32, %c0_i32_0 : i32, i32
  }
  func.func @transform_2(%arg0: i32) -> (i32, i32) {
    %c0_i32 = arith.constant 0 : i32
    %c0_i32_0 = arith.constant 0 : i32
    %c0_i32_1 = arith.constant 0 : i32
    return %c0_i32, %c0_i32_0 : i32, i32
  }
  func.func @transform_3(%arg0: i32) -> (i32, i32) {
    %c0_i32 = arith.constant 0 : i32
    %c0_i32_0 = arith.constant 0 : i32
    %c0_i32_1 = arith.constant 0 : i32
    return %c0_i32, %c0_i32_0 : i32, i32
  }
  func.func @transform_4(%arg0: i32) -> (i32, i32) {
    %c0_i32 = arith.constant 0 : i32
    %c0_i32_0 = arith.constant 0 : i32
    %c0_i32_1 = arith.constant 0 : i32
    return %c0_i32, %c0_i32_0 : i32, i32
  }
  func.func @transform_5(%arg0: i32) -> (i32, i32) {
    %c0_i32 = arith.constant 0 : i32
    %c0_i32_0 = arith.constant 0 : i32
    return %arg0, %c0_i32 : i32, i32
  }
}

</mosaic_0001>

<llo_original>
// kernel: tpu_custom_call.1
$region0: #{tpu_custom_call.1}
  #allocation0 [shape = 'u32[]', space=smem, size = 0x4, offset = 0x4, fixed_abs, tag = 'smem constant byte address 0x4 - core index']
  #allocation1 [shape = 'u32[144,128]{1,0:T(1,128)}', space=vmem, size = 0x12000, scoped, tag = 'internal scratch']
  %s0 = inlined_call_operand.vmem [shape: f32[16,72], index: 0, kind: input, shape index: {}]
  %s1 = inlined_call_operand.vmem [shape: bf16[72,384], index: 1, kind: input, shape index: {}]
  %s2 = inlined_call_operand.vmem [shape: f32[1,384], index: 2, kind: input, shape index: {}]
  %s3 = inlined_call_operand.vmem [shape: bf16[384,72], index: 3, kind: input, shape index: {}]
  %s4 = inlined_call_operand.vmem [shape: f32[1,72], index: 4, kind: input, shape index: {}]
  %s5 = inlined_call_operand.hbm [shape: f32[16,72], index: 5, kind: output, shape index: {}]
  %s6 = sld [smem:[#allocation0]]
  $region30: #{tpu_custom_call.1} parent=0
    _
  %s8 = ssub.s32 1, %s6
  %s9 = scalar_select 0, %s8, %s6
  $region1: #{tpu_custom_call.1} parent=0
    #allocation2 [shape = 'u8[8192]{0}', space=vmem, size = 0x2000, scoped, tag = 'output window, operand 0, single buffered']
    #allocation3 [shape = 's32[1]{0}', space=sflag, size = 0x4, scoped, tag = 'scoped memory for tpu_custom_call.1']
    %10 = vsyncpa [#allocation3], 0
    // Predicated region
    $region2: #{tpu_custom_call.1} parent=1 // pred_check
      _
    $region3: #{tpu_custom_call.1} parent=1 // pred_check_branch
      %12 = sbr.rel (0) target = $region5
    $region4: #{tpu_custom_call.1} parent=1 // pred_region
      _
    $region5: #{tpu_custom_call.1} parent=1 // pred_fallthru
      _
    // Predicated region
    $region6: #{tpu_custom_call.1} parent=1 // pred_check
      _
    $region7: #{tpu_custom_call.1} parent=1 // pred_check_branch
      %14 = sbr.rel (0) target = $region9
    $region8: #{tpu_custom_call.1} parent=1 // pred_region
      _
    $region9: #{tpu_custom_call.1} parent=1 // pred_fallthru
      _
    // Predicated region
    $region10: #{tpu_custom_call.1} parent=1 // pred_check
      _
    $region11: #{tpu_custom_call.1} parent=1 // pred_check_branch
      %16 = sbr.rel (0) target = $region13
    $region12: #{tpu_custom_call.1} parent=1 // pred_region
      _
    $region13: #{tpu_custom_call.1} parent=1 // pred_fallthru
      _
    // Predicated region
    $region14: #{tpu_custom_call.1} parent=1 // pred_check
      _
    $region15: #{tpu_custom_call.1} parent=1 // pred_check_branch
      %18 = sbr.rel (0) target = $region17
    $region16: #{tpu_custom_call.1} parent=1 // pred_region
      _
    $region17: #{tpu_custom_call.1} parent=1 // pred_fallthru
      _
    // Predicated region
    $region18: #{tpu_custom_call.1} parent=1 // pred_check
      _
    $region19: #{tpu_custom_call.1} parent=1 // pred_check_branch
      %20 = sbr.rel (0) target = $region21
    $region20: #{tpu_custom_call.1} parent=1 // pred_region
      _
    $region21: #{tpu_custom_call.1} parent=1 // pred_fallthru
      _
    %v22 = vld [vmem:[%s0] sm:$0xff]
    %v23 = vld [vmem:[%s0 + $0x8] sm:$0xff]
    %v24 = vpack.c.bf16 %v23, %v22
    %v25 = vld [vmem:[%s1] sm:$0xff]
    %v26 = vld [vmem:[%s1 + $0x8] sm:$0xf]
    %v27 = vld [vmem:[%s1 + $0xc] sm:$0xff]
    %v28 = vld [vmem:[%s1 + $0x14] sm:$0xf]
    %v29 = vld [vmem:[%s1 + $0x18] sm:$0xff]
    %v30 = vld [vmem:[%s1 + $0x20] sm:$0xf]
    %v31 = vld [vmem:[%s1 + $0x24] sm:$0xff]
    %v32 = vld [vmem:[%s1 + $0x2c] sm:$0xf]
    %v33 = vld [vmem:[%s1 + $0x30] sm:$0xff]
    %v34 = vld [vmem:[%s1 + $0x38] sm:$0xf]
    %v35 = vld [vmem:[%s1 + $0x3c] sm:$0xff]
    %v36 = vld [vmem:[%s1 + $0x44] sm:$0xf]
    %v37 = vld [vmem:[%s1 + $0x48] sm:$0xff]
    %v38 = vld [vmem:[%s1 + $0x50] sm:$0xf]
    %v39 = vld [vmem:[%s1 + $0x54] sm:$0xff]
    %v40 = vld [vmem:[%s1 + $0x5c] sm:$0xf]
    %v41 = vld [vmem:[%s1 + $0x60] sm:$0xff]
    %v42 = vld [vmem:[%s1 + $0x68] sm:$0xf]
    %v43 = vld [vmem:[%s2] sm:$0x7]
    %v45 = vlaneseq
    %v46 = vshrl.u32 %v45, 7
    %v47 = vsub.s32 0, %v46
    %v48 = vrot.slane %v43, %v47
    %v49 = vlaneseq
    %v50 = vshrl.u32 %v49, 7
    %v51 = vsub.s32 1, %v50
    %v52 = vrot.slane %v43, %v51
    %v53 = vlaneseq
    %v54 = vshrl.u32 %v53, 7
    %v55 = vsub.s32 2, %v54
    %v56 = vrot.slane %v43, %v55
    %v78 = vunpack.c.l.b16 %v25
    %v79 = vunpack.c.h.b16 %v25
    %v80 = vunpack.c.l.b16 %v26
    %v81 = vunpack.c.l.b16 %v27
    %v82 = vunpack.c.h.b16 %v27
    %v83 = vunpack.c.l.b16 %v28
    %v84 = vunpack.c.l.b16 %v29
    %v85 = vunpack.c.h.b16 %v29
    %v86 = vunpack.c.l.b16 %v30
    %v87 = vunpack.c.l.b16 %v31
    %v88 = vunpack.c.h.b16 %v31
    %v89 = vunpack.c.l.b16 %v32
    %v90 = vunpack.c.l.b16 %v33
    %v91 = vunpack.c.h.b16 %v33
    %v92 = vunpack.c.l.b16 %v34
    %v93 = vunpack.c.l.b16 %v35
    %v94 = vunpack.c.h.b16 %v35
    %v95 = vunpack.c.l.b16 %v36
    %v96 = vunpack.c.l.b16 %v37
    %v97 = vunpack.c.h.b16 %v37
    %v98 = vunpack.c.l.b16 %v38
    %v99 = vunpack.c.l.b16 %v39
    %v100 = vunpack.c.h.b16 %v39
    %v101 = vunpack.c.l.b16 %v40
    %v102 = vunpack.c.l.b16 %v41
    %v103 = vunpack.c.h.b16 %v41
    %v104 = vunpack.c.l.b16 %v42
    %v105 = vpack.c.b16 %v81, %v78
    %v106 = vpack.c.b16 %v82, %v79
    %v107 = vpack.c.b16 %v83, %v80
    %v108 = vpack.c.b16 %v87, %v84
    %v109 = vpack.c.b16 %v88, %v85
    %v110 = vpack.c.b16 %v89, %v86
    %v111 = vpack.c.b16 %v93, %v90
    %v112 = vpack.c.b16 %v94, %v91
    %v113 = vpack.c.b16 %v95, %v92
    %v114 = vpack.c.b16 %v99, %v96
    %v115 = vpack.c.b16 %v100, %v97
    %v116 = vpack.c.b16 %v101, %v98
    %v117 = vpack.c.b16 %v102, %v102
    %v118 = vpack.c.b16 %v103, %v103
    %v119 = vpack.c.b16 %v104, %v104
    %vm132 = vcmask 588800
    %v134 = vsel %vm132, %v24, 0
    %vm136 = vcmask 1043456
    %v138 = vsel %vm136, %v117, 0
    %v141 = vsel %vm136, %v118, 0
    %v144 = vsel %vm136, %v119, 0
    %146 = vmatprep.subr.bf16.mxu0 0
    %147 = vmatpush1.bf16.msra.mxu0 0
    %148 = vmatprep.subr.bf16.mxu0 0
    %149 = vmatpush1.bf16.msra.mxu0 0
    %150 = vmatprep.subr.bf16.mxu0 0
    %151 = vmatpush1.bf16.msra.mxu0 0
    %152 = vmatprep.subr.bf16.mxu0 %v141
    %153 = vmatpush1.bf16.msra.mxu0 %v138
    %154 = vmatprep.subr.bf16.mxu0 %v115
    %155 = vmatpush1.bf16.msra.mxu0 %v114
    %156 = vmatprep.subr.bf16.mxu0 %v112
    %157 = vmatpush1.bf16.msra.mxu0 %v111
    %158 = vmatprep.subr.bf16.mxu0 %v109
    %159 = vmatpush1.bf16.msra.mxu0 %v108
    %160 = vmatprep.subr.bf16.mxu0 %v106
    %161 = vmatpush1.bf16.msra.mxu0 %v105
    %162 = vmatprep.subr.bf16.mxu0 0
    %163 = vmatpush2.bf16.msra.mxu0 0
    %164 = vmatprep.subr.bf16.mxu0 0
    %165 = vmatpush2.bf16.msra.mxu0 0
    %166 = vmatprep.subr.bf16.mxu0 0
    %167 = vmatpush2.bf16.msra.mxu0 0
    %168 = vmatprep.subr.bf16.mxu0 0
    %169 = vmatpush2.bf16.msra.mxu0 0
    %170 = vmatprep.subr.bf16.mxu0 0
    %171 = vmatpush2.bf16.msra.mxu0 0
    %172 = vmatprep.subr.bf16.mxu0 0
    %173 = vmatpush2.bf16.msra.mxu0 0
    %174 = vmatprep.subr.bf16.mxu0 0
    %175 = vmatpush2.bf16.msra.mxu0 0
    %176 = vmatprep.subr.bf16.mxu0 0
    %177 = vmatpush2.bf16.msra.mxu0 0
    %178 = vmatprep.mubr.bf16.mxu0 0
    %179 = vmatmul.mubr.bf16.gmra.mxu0 %v134
    %v180 = vpop.f32.mrf.mxu0
    %v181 = vadd.f32 %v48, %v180
    %v182 = vpop.f32.mrf.mxu0
    %v183 = vadd.f32 %v52, %v182
    %v184 = vpop.f32.mrf.mxu0
    %v185 = vadd.f32 %v48, %v184
    %v186 = vpop.f32.mrf.mxu0
    %v187 = vadd.f32 %v52, %v186
    %188 = vdwg.mxu0
    %189 = vmatprep.subr.bf16.mxu0 0
    %190 = vmatpush1.bf16.msra.mxu0 0
    %191 = vmatprep.subr.bf16.mxu0 0
    %192 = vmatpush1.bf16.msra.mxu0 0
    %193 = vmatprep.subr.bf16.mxu0 0
    %194 = vmatpush1.bf16.msra.mxu0 0
    %195 = vmatprep.subr.bf16.mxu0 0
    %196 = vmatpush1.bf16.msra.mxu0 %v144
    %197 = vmatprep.subr.bf16.mxu0 0
    %198 = vmatpush1.bf16.msra.mxu0 %v116
    %199 = vmatprep.subr.bf16.mxu0 0
    %200 = vmatpush1.bf16.msra.mxu0 %v113
    %201 = vmatprep.subr.bf16.mxu0 0
    %202 = vmatpush1.bf16.msra.mxu0 %v110
    %203 = vmatprep.subr.bf16.mxu0 0
    %204 = vmatpush1.bf16.msra.mxu0 %v107
    %205 = vmatprep.subr.bf16.mxu0 0
    %206 = vmatpush2.bf16.msra.mxu0 0
    %207 = vmatprep.subr.bf16.mxu0 0
    %208 = vmatpush2.bf16.msra.mxu0 0
    %209 = vmatprep.subr.bf16.mxu0 0
    %210 = vmatpush2.bf16.msra.mxu0 0
    %211 = vmatprep.subr.bf16.mxu0 0
    %212 = vmatpush2.bf16.msra.mxu0 0
    %213 = vmatprep.subr.bf16.mxu0 0
    %214 = vmatpush2.bf16.msra.mxu0 0
    %215 = vmatprep.subr.bf16.mxu0 0
    %216 = vmatpush2.bf16.msra.mxu0 0
    %217 = vmatprep.subr.bf16.mxu0 0
    %218 = vmatpush2.bf16.msra.mxu0 0
    %219 = vmatprep.subr.bf16.mxu0 0
    %220 = vmatpush2.bf16.msra.mxu0 0
    %221 = vmatprep.mubr.bf16.mxu0 0
    %222 = vmatmul.mubr.bf16.gmra.mxu0 %v134
    %v223 = vpop.f32.mrf.mxu0
    %v224 = vadd.f32 %v56, %v223
    %v225 = vpop.f32.mrf.mxu0
    %v226 = vpop.f32.mrf.mxu0
    %v227 = vadd.f32 %v56, %v226
    %v228 = vpop.f32.mrf.mxu0
    %229 = vdwg.mxu0
    %v230 = vmax.f32 %v181, 0.0
    %v231 = vmax.f32 %v183, 0.0
    %v232 = vmax.f32 %v224, 0.0
    %v233 = vmax.f32 %v185, 0.0
    %v234 = vmax.f32 %v187, 0.0
    %v235 = vmax.f32 %v227, 0.0
    %v236 = vpack.c.bf16 %v233, %v230
    %v237 = vpack.c.bf16 %v234, %v231
    %v238 = vpack.c.bf16 %v235, %v232
    %v239 = vld [vmem:[%s3] sm:$0xf]
    %v240 = vld [vmem:[%s3 + $0x4] sm:$0xf]
    %v241 = vld [vmem:[%s3 + $0x8] sm:$0xf]
    %v242 = vld [vmem:[%s3 + $0xc] sm:$0xf]
    %v243 = vld [vmem:[%s3 + $0x10] sm:$0xf]
    %v244 = vld [vmem:[%s3 + $0x14] sm:$0xf]
    %v245 = vld [vmem:[%s3 + $0x18] sm:$0xf]
    %v246 = vld [vmem:[%s3 + $0x1c] sm:$0xf]
    %v247 = vld [vmem:[%s3 + $0x20] sm:$0xf]
    %v248 = vld [vmem:[%s3 + $0x24] sm:$0xf]
    %v249 = vld [vmem:[%s3 + $0x28] sm:$0xf]
    %v250 = vld [vmem:[%s3 + $0x2c] sm:$0xf]
    %v251 = vld [vmem:[%s3 + $0x30] sm:$0xf]
    %v252 = vld [vmem:[%s3 + $0x34] sm:$0xf]
    %v253 = vld [vmem:[%s3 + $0x38] sm:$0xf]
    %v254 = vld [vmem:[%s3 + $0x3c] sm:$0xf]
    %v255 = vld [vmem:[%s3 + $0x40] sm:$0xf]
    %v256 = vld [vmem:[%s3 + $0x44] sm:$0xf]
    %v257 = vld [vmem:[%s3 + $0x48] sm:$0xf]
    %v258 = vld [vmem:[%s3 + $0x4c] sm:$0xf]
    %v259 = vld [vmem:[%s3 + $0x50] sm:$0xf]
    %v260 = vld [vmem:[%s3 + $0x54] sm:$0xf]
    %v261 = vld [vmem:[%s3 + $0x58] sm:$0xf]
    %v262 = vld [vmem:[%s3 + $0x5c] sm:$0xf]
    %v263 = vld [vmem:[%s3 + $0x60] sm:$0xf]
    %v264 = vld [vmem:[%s3 + $0x64] sm:$0xf]
    %v265 = vld [vmem:[%s3 + $0x68] sm:$0xf]
    %v266 = vld [vmem:[%s3 + $0x6c] sm:$0xf]
    %v267 = vld [vmem:[%s3 + $0x70] sm:$0xf]
    %v268 = vld [vmem:[%s3 + $0x74] sm:$0xf]
    %v269 = vld [vmem:[%s3 + $0x78] sm:$0xf]
    %v270 = vld [vmem:[%s3 + $0x7c] sm:$0xf]
    %v271 = vld [vmem:[%s3 + $0x80] sm:$0xf]
    %v272 = vld [vmem:[%s3 + $0x84] sm:$0xf]
    %v273 = vld [vmem:[%s3 + $0x88] sm:$0xf]
    %v274 = vld [vmem:[%s3 + $0x8c] sm:$0xf]
    %v275 = vld [vmem:[%s3 + $0x90] sm:$0xf]
    %v276 = vld [vmem:[%s3 + $0x94] sm:$0xf]
    %v277 = vld [vmem:[%s3 + $0x98] sm:$0xf]
    %v278 = vld [vmem:[%s3 + $0x9c] sm:$0xf]
    %v279 = vld [vmem:[%s3 + $0xa0] sm:$0xf]
    %v280 = vld [vmem:[%s3 + $0xa4] sm:$0xf]
    %v281 = vld [vmem:[%s3 + $0xa8] sm:$0xf]
    %v282 = vld [vmem:[%s3 + $0xac] sm:$0xf]
    %v283 = vld [vmem:[%s3 + $0xb0] sm:$0xf]
    %v284 = vld [vmem:[%s3 + $0xb4] sm:$0xf]
    %v285 = vld [vmem:[%s3 + $0xb8] sm:$0xf]
    %v286 = vld [vmem:[%s3 + $0xbc] sm:$0xf]
    %v287 = vld [vmem:[%s4] sm:$0x1]
    %v289 = vlaneseq
    %v290 = vshrl.u32 %v289, 7
    %v291 = vsub.s32 0, %v290
    %v292 = vrot.slane %v287, %v291
    %v342 = vunpack.c.l.b16 %v239
    %v343 = vunpack.c.l.b16 %v240
    %v344 = vunpack.c.l.b16 %v241
    %v345 = vunpack.c.l.b16 %v242
    %v346 = vunpack.c.l.b16 %v243
    %v347 = vunpack.c.l.b16 %v244
    %v348 = vunpack.c.l.b16 %v245
    %v349 = vunpack.c.l.b16 %v246
    %v350 = vunpack.c.l.b16 %v247
    %v351 = vunpack.c.l.b16 %v248
    %v352 = vunpack.c.l.b16 %v249
    %v353 = vunpack.c.l.b16 %v250
    %v354 = vunpack.c.l.b16 %v251
    %v355 = vunpack.c.l.b16 %v252
    %v356 = vunpack.c.l.b16 %v253
    %v357 = vunpack.c.l.b16 %v254
    %v358 = vunpack.c.l.b16 %v255
    %v359 = vunpack.c.l.b16 %v256
    %v360 = vunpack.c.l.b16 %v257
    %v361 = vunpack.c.l.b16 %v258
    %v362 = vunpack.c.l.b16 %v259
    %v363 = vunpack.c.l.b16 %v260
    %v364 = vunpack.c.l.b16 %v261
    %v365 = vunpack.c.l.b16 %v262
    %v366 = vunpack.c.l.b16 %v263
    %v367 = vunpack.c.l.b16 %v264
    %v368 = vunpack.c.l.b16 %v265
    %v369 = vunpack.c.l.b16 %v266
    %v370 = vunpack.c.l.b16 %v267
    %v371 = vunpack.c.l.b16 %v268
    %v372 = vunpack.c.l.b16 %v269
    %v373 = vunpack.c.l.b16 %v270
    %v374 = vunpack.c.l.b16 %v271
    %v375 = vunpack.c.l.b16 %v272
    %v376 = vunpack.c.l.b16 %v273
    %v377 = vunpack.c.l.b16 %v274
    %v378 = vunpack.c.l.b16 %v275
    %v379 = vunpack.c.l.b16 %v276
    %v380 = vunpack.c.l.b16 %v277
    %v381 = vunpack.c.l.b16 %v278
    %v382 = vunpack.c.l.b16 %v279
    %v383 = vunpack.c.l.b16 %v280
    %v384 = vunpack.c.l.b16 %v281
    %v385 = vunpack.c.l.b16 %v282
    %v386 = vunpack.c.l.b16 %v283
    %v387 = vunpack.c.l.b16 %v284
    %v388 = vunpack.c.l.b16 %v285
    %v389 = vunpack.c.l.b16 %v286
    %v390 = vpack.c.b16 %v343, %v342
    %v391 = vpack.c.b16 %v345, %v344
    %v392 = vpack.c.b16 %v347, %v346
    %v393 = vpack.c.b16 %v349, %v348
    %v394 = vpack.c.b16 %v351, %v350
    %v395 = vpack.c.b16 %v353, %v352
    %v396 = vpack.c.b16 %v355, %v354
    %v397 = vpack.c.b16 %v357, %v356
    %v398 = vpack.c.b16 %v359, %v358
    %v399 = vpack.c.b16 %v361, %v360
    %v400 = vpack.c.b16 %v363, %v362
    %v401 = vpack.c.b16 %v365, %v364
    %v402 = vpack.c.b16 %v367, %v366
    %v403 = vpack.c.b16 %v369, %v368
    %v404 = vpack.c.b16 %v371, %v370
    %v405 = vpack.c.b16 %v373, %v372
    %v406 = vpack.c.b16 %v375, %v374
    %v407 = vpack.c.b16 %v377, %v376
    %v408 = vpack.c.b16 %v379, %v378
    %v409 = vpack.c.b16 %v381, %v380
    %v410 = vpack.c.b16 %v383, %v382
    %v411 = vpack.c.b16 %v385, %v384
    %v412 = vpack.c.b16 %v387, %v386
    %v413 = vpack.c.b16 %v389, %v388
    %438 = vmatprep.subr.bf16.mxu0 0
    %439 = vmatpush1.bf16.msra.mxu0 %v397
    %440 = vmatprep.subr.bf16.mxu0 0
    %441 = vmatpush1.bf16.msra.mxu0 %v396
    %442 = vmatprep.subr.bf16.mxu0 0
    %443 = vmatpush1.bf16.msra.mxu0 %v395
    %444 = vmatprep.subr.bf16.mxu0 0
    %445 = vmatpush1.bf16.msra.mxu0 %v394
    %446 = vmatprep.subr.bf16.mxu0 0
    %447 = vmatpush1.bf16.msra.mxu0 %v393
    %448 = vmatprep.subr.bf16.mxu0 0
    %449 = vmatpush1.bf16.msra.mxu0 %v392
    %450 = vmatprep.subr.bf16.mxu0 0
    %451 = vmatpush1.bf16.msra.mxu0 %v391
    %452 = vmatprep.subr.bf16.mxu0 0
    %453 = vmatpush1.bf16.msra.mxu0 %v390
    %454 = vmatprep.subr.bf16.mxu0 0
    %455 = vmatpush2.bf16.msra.mxu0 %v405
    %456 = vmatprep.subr.bf16.mxu0 0
    %457 = vmatpush2.bf16.msra.mxu0 %v404
    %458 = vmatprep.subr.bf16.mxu0 0
    %459 = vmatpush2.bf16.msra.mxu0 %v403
    %460 = vmatprep.subr.bf16.mxu0 0
    %461 = vmatpush2.bf16.msra.mxu0 %v402
    %462 = vmatprep.subr.bf16.mxu0 0
    %463 = vmatpush2.bf16.msra.mxu0 %v401
    %464 = vmatprep.subr.bf16.mxu0 0
    %465 = vmatpush2.bf16.msra.mxu0 %v400
    %466 = vmatprep.subr.bf16.mxu0 0
    %467 = vmatpush2.bf16.msra.mxu0 %v399
    %468 = vmatprep.subr.bf16.mxu0 0
    %469 = vmatpush2.bf16.msra.mxu0 %v398
    %470 = vmatprep.mubr.bf16.mxu0 %v237
    %471 = vmatmul.mubr.bf16.gmra.mxu0 %v236
    %v472 = vpop.f32.mrf.mxu0
    %v473 = vadd.f32 %v292, %v472
    %v474 = vpop.f32.mrf.mxu0
    %v475 = vpop.f32.mrf.mxu0
    %v476 = vadd.f32 %v292, %v475
    %v477 = vpop.f32.mrf.mxu0
    %478 = vdwg.mxu0
    %479 = vmatprep.subr.bf16.mxu0 0
    %480 = vmatpush1.bf16.msra.mxu0 %v413
    %481 = vmatprep.subr.bf16.mxu0 0
    %482 = vmatpush1.bf16.msra.mxu0 %v412
    %483 = vmatprep.subr.bf16.mxu0 0
    %484 = vmatpush1.bf16.msra.mxu0 %v411
    %485 = vmatprep.subr.bf16.mxu0 0
    %486 = vmatpush1.bf16.msra.mxu0 %v410
    %487 = vmatprep.subr.bf16.mxu0 0
    %488 = vmatpush1.bf16.msra.mxu0 %v409
    %489 = vmatprep.subr.bf16.mxu0 0
    %490 = vmatpush1.bf16.msra.mxu0 %v408
    %491 = vmatprep.subr.bf16.mxu0 0
    %492 = vmatpush1.bf16.msra.mxu0 %v407
    %493 = vmatprep.subr.bf16.mxu0 0
    %494 = vmatpush1.bf16.msra.mxu0 %v406
    %495 = vmatprep.subr.bf16.mxu0 0
    %496 = vmatpush2.bf16.msra.mxu0 0
    %497 = vmatprep.subr.bf16.mxu0 0
    %498 = vmatpush2.bf16.msra.mxu0 0
    %499 = vmatprep.subr.bf16.mxu0 0
    %500 = vmatpush2.bf16.msra.mxu0 0
    %501 = vmatprep.subr.bf16.mxu0 0
    %502 = vmatpush2.bf16.msra.mxu0 0
    %503 = vmatprep.subr.bf16.mxu0 0
    %504 = vmatpush2.bf16.msra.mxu0 0
    %505 = vmatprep.subr.bf16.mxu0 0
    %506 = vmatpush2.bf16.msra.mxu0 0
    %507 = vmatprep.subr.bf16.mxu0 0
    %508 = vmatpush2.bf16.msra.mxu0 0
    %509 = vmatprep.subr.bf16.mxu0 0
    %510 = vmatpush2.bf16.msra.mxu0 0
    %511 = vmatprep.mubr.bf16.mxu0 0
    %512 = vmatmul.mubr.bf16.gmra.mxu0 %v238
    %v513 = vpop.f32.mrf.mxu0
    %v514 = vadd.f32 %v473, %v513
    %v515 = vpop.f32.mrf.mxu0
    %v516 = vpop.f32.mrf.mxu0
    %v517 = vadd.f32 %v476, %v516
    %v518 = vpop.f32.mrf.mxu0
    %519 = vdwg.mxu0
    %520 = vst.msk [vmem:[#allocation2] sm:$0xff] %vm132, %v514
    %521 = vst.msk [vmem:[#allocation2 + $0x8] sm:$0xff] %vm132, %v517
    // Predicated region
    $region22: #{tpu_custom_call.1} parent=1 // pred_check
      _
    $region23: #{tpu_custom_call.1} parent=1 // pred_check_branch
      %523 = sbr.rel (0) target = $region25
    $region24: #{tpu_custom_call.1} parent=1 // pred_region
      %s525 = ssub.s32 256, 256
      %526 = vsyncadd [#allocation3], %s525
      %s527 = sshll.u32 [#allocation2], 4
      %s528 = int_to_ptr.vmem [resolvable:$true] %s527
      %533 = dma.vmem_to_hbm [thread:$0]  %s528, 256, %s5, [#allocation3], 128, 128, 8
    $region25: #{tpu_custom_call.1} parent=1 // pred_fallthru
      _
    // Predicated region
    $region26: #{tpu_custom_call.1} parent=1 // pred_check
      _
    $region27: #{tpu_custom_call.1} parent=1 // pred_check_branch
      %535 = sbr.rel (0) target = $region29
    $region28: #{tpu_custom_call.1} parent=1 // pred_region
      %536 = dma.done [#allocation3], 256
    $region29: #{tpu_custom_call.1} parent=1 // pred_fallthru
      _
    %537 = vsyncpa [#allocation3], 1

</llo_original>
